<compile_context>
chip_gen: v6e
topology: v6e:2x2x1
jax: 0.10.0
libtpu: 0.0.40
codegen_flags: <defaults>
</compile_context>

<pallas_src>
import functools

import jax
import jax.numpy as jnp
from jax.experimental import pallas as pl
from jax.experimental.pallas import tpu as pltpu


def _round_up(x, m):
    return (x + m - 1) // m * m


# ----------------------------------------------------------------------------
# One-time probe: does this jax accept pipeline_mode=pl.Buffered(1) on a
# pallas_call BlockSpec?  Falls back to default double-buffering if not.
# ----------------------------------------------------------------------------
@functools.lru_cache(maxsize=None)
def _single_buffer_supported():
    try:
        def _k(x_ref, c_ref, o_ref):
            o_ref[...] = x_ref[...] + c_ref[...]

        f = pl.pallas_call(
            _k,
            out_shape=jax.ShapeDtypeStruct((16, 128), jnp.float32),
            grid=(2,),
            in_specs=[
                pl.BlockSpec((8, 128), lambda i: (i, 0)),
                pl.BlockSpec((8, 128), lambda i: (0, 0),
                             pipeline_mode=pl.Buffered(1)),
            ],
            out_specs=pl.BlockSpec((8, 128), lambda i: (i, 0)),
        )
        x = jnp.zeros((16, 128), jnp.float32)
        c = jnp.zeros((8, 128), jnp.float32)
        jax.block_until_ready(jax.jit(f)(x, c))
        return True
    except Exception:
        return False


# ----------------------------------------------------------------------------
# Kernel: fused (distance -> 6-layer MLP) on one row-tile of `a`.
# ----------------------------------------------------------------------------
def _distance_mlp_kernel(a_ref, w1_ref, w2_ref, w3_ref, w4_ref, w5_ref,
                         w6_ref, ball_ref, o_ref):
    # Layer 1: the last two columns of `a` are [||a||^2, 1] and the last two
    # rows of w1 are [colsum(W1); b1 + ||b||^2^T W1], so this single dot is
    #   dist(a, b) @ W1 + b1   with dist fused algebraically into W1.
    h = jnp.dot(a_ref[...], w1_ref[...], preferred_element_type=jnp.float32)
    h = jnp.maximum(h, 0.0)

    def linear(h, w_ref, bias_row, relu):
        y = jnp.dot(h.astype(w_ref.dtype), w_ref[...],
                    preferred_element_type=jnp.float32)
        y = y + ball_ref[bias_row:bias_row + 1, :y.shape[1]]
        return jnp.maximum(y, 0.0) if relu else y

    h = linear(h, w2_ref, 0, True)
    h = linear(h, w3_ref, 1, True)
    h = linear(h, w4_ref, 2, True)
    h = linear(h, w5_ref, 3, True)
    h = linear(h, w6_ref, 4, False)

    o_ref[...] = h.astype(o_ref.dtype)


# ----------------------------------------------------------------------------
# Wrapper-side operand preparation: fusion, 128-padding, bias packing, cast.
# ----------------------------------------------------------------------------
def _prep_kernel_operands(b, params, compute_dtype):
    """Returns (weights [w1_aug, w2..w6], packed biases (8,max_H) f32,
    padded layer widths, augmented K of layer 1)."""
    w1, b1 = params[0]
    _, h1 = w1.shape
    b32 = b.astype(jnp.float32)
    b_sq = jnp.sum(b32 * b32, axis=-1, keepdims=True)          # (m, 1)

    w1_eff = -2.0 * (b32.T @ w1)                               # (d, h1)
    w1_colsum = jnp.sum(w1, axis=0)                            # (h1,)
    b1_eff = (b1 + b_sq.T @ w1).reshape(-1)                    # (h1,)

    d = w1_eff.shape[0]
    k_aug = _round_up(d + 2, 8)
    h1p = _round_up(h1, 128)
    w1_aug = jnp.zeros((k_aug, h1p), jnp.float32)
    w1_aug = w1_aug.at[:d, :h1].set(w1_eff)
    w1_aug = w1_aug.at[d, :h1].set(w1_colsum)
    w1_aug = w1_aug.at[d + 1, :h1].set(b1_eff)

    weights = [w1_aug.astype(compute_dtype)]
    widths = [h1p]
    bias_rows = []
    prev_p = h1p
    for w, bias in params[1:]:
        out_p = _round_up(w.shape[1], 128)
        wp = jnp.zeros((prev_p, out_p), jnp.float32)
        wp = wp.at[:w.shape[0], :w.shape[1]].set(w)
        weights.append(wp.astype(compute_dtype))
        bias_rows.append(bias.reshape(-1))
        widths.append(out_p)
        prev_p = out_p

    # Pack remaining biases into one sublane-padded (8, max_H) f32 operand.
    max_w = max(widths[1:])
    b_all = jnp.zeros((8, max_w), jnp.float32)
    for r, bias in enumerate(bias_rows):
        b_all = b_all.at[r, :bias.shape[0]].set(bias)

    return weights, b_all, widths, k_aug


def _distance_forward_impl(a, b, params, out_channel, use_bf16, single_buffer):
    n, d = a.shape
    compute_dtype = jnp.bfloat16 if use_bf16 else jnp.float32

    weights, b_all, widths, k_aug = _prep_kernel_operands(
        b, params, compute_dtype)
    out_p = widths[-1]

    # Balanced, 8-aligned row tiles: cap at 1024 rows/tile (weights stay
    # VMEM-resident so big tiles just amortise the ~0.35 us/step overhead),
    # and use >= 2 tiles for larger n so v7x megacore can shard the row axis.
    max_tile = 1024
    num_tiles = max(1, pl.cdiv(n, max_tile))
    if num_tiles == 1 and n > 256:
        num_tiles = 2
    tile_n = _round_up(pl.cdiv(n, num_tiles), 8)
    n_pad = tile_n * num_tiles

    a32 = a.astype(jnp.float32)
    a_sq = jnp.sum(a32 * a32, axis=-1, keepdims=True)          # f32 reduction
    a_aug = jnp.concatenate(
        [a32, a_sq, jnp.ones((n, 1), jnp.float32)], axis=1)    # (n, d+2)
    a_aug = jnp.pad(a_aug, ((0, n_pad - n), (0, k_aug - (d + 2))))
    a_aug = a_aug.astype(compute_dtype)

    grid = (num_tiles,)
    a_spec = pl.BlockSpec((tile_n, k_aug), lambda i: (i, 0))
    out_spec = pl.BlockSpec((tile_n, out_p), lambda i: (i, 0))
    # Constant index_map -> weights/biases stay VMEM-resident across the grid;
    # single-buffer them when supported (they never change, the 2nd buffer is
    # pure VMEM waste).
    const_kwargs = dict(pipeline_mode=pl.Buffered(1)) if single_buffer else {}
    w_specs = [pl.BlockSpec(w.shape, lambda i: (0, 0), **const_kwargs)
               for w in weights]
    ball_spec = pl.BlockSpec(b_all.shape, lambda i: (0, 0), **const_kwargs)

    # Right-sized VMEM limit (portable across v5e/v6e/v7x; never ask for all
    # of v7x's 64 MiB).
    itemsize = jnp.dtype(compute_dtype).itemsize
    weight_bytes = sum(w.size * itemsize for w in weights) + b_all.size * 4
    if not single_buffer:
        weight_bytes *= 2                       # default double-buffering
    io_bytes = 2 * (tile_n * k_aug * itemsize + tile_n * out_p * 4)
    act_bytes = 2 * tile_n * max(widths) * (4 + itemsize)
    vmem_need = weight_bytes + io_bytes + act_bytes
    vmem_limit = int(min(max(int(vmem_need * 1.5), 32 * 2 ** 20), 48 * 2 ** 20))

    layer_in = [k_aug] + widths[:-1]
    flops = 2 * n_pad * sum(i * o for i, o in zip(layer_in, widths))
    bytes_accessed = (a_aug.size * itemsize + n_pad * out_p * 4
                      + sum(w.size * itemsize for w in weights)
                      + b_all.size * 4)
    cost = pl.CostEstimate(flops=int(flops), transcendentals=0,
                           bytes_accessed=int(bytes_accessed))

    out = pl.pallas_call(
        _distance_mlp_kernel,
        out_shape=jax.ShapeDtypeStruct((n_pad, out_p), jnp.float32),
        grid=grid,
        in_specs=[a_spec] + w_specs + [ball_spec],
        out_specs=out_spec,
        compiler_params=pltpu.CompilerParams(
            dimension_semantics=("parallel",),
            vmem_limit_bytes=vmem_limit,
        ),
        cost_estimate=cost,
    )(a_aug, *weights, b_all)

    return out[:n, :out_channel]


_distance_forward_jit = jax.jit(
    _distance_forward_impl,
    static_argnames=("out_channel", "use_bf16", "single_buffer"))


def distance_forward(a, b, params, out_channel=5, use_bf16=True):
    """Pallas forward pass of the `distance` module."""
    m = b.shape[0]
    w1 = params[0][0]
    if m != w1.shape[0]:
        raise ValueError(
            f"b has {m} rows but the first Linear expects in_channel={w1.shape[0]}")
    if params[-1][0].shape[1] != out_channel:
        raise ValueError("out_channel does not match the last Linear's output dim")
    if len(params) != 6:
        raise ValueError("expected exactly 6 Linear layers")
    params_t = tuple((jnp.asarray(w), jnp.asarray(bias)) for w, bias in params)
    return _distance_forward_jit(
        a, b, params_t, out_channel=out_channel, use_bf16=use_bf16,
        single_buffer=_single_buffer_supported())


# ----------------------------------------------------------------------------
# Parameter init (matches nn.Linear shapes; W stored as (in, out)).
# ----------------------------------------------------------------------------
def init_params(key, in_channel=5, out_channel=5, hid_channel=256):
    dims = [in_channel, hid_channel * 4, hid_channel * 3, hid_channel * 2,
            hid_channel, 128, out_channel]
    params = []
    for i in range(len(dims) - 1):
        key, kw, kb = jax.random.split(key, 3)
        bound = 1.0 / jnp.sqrt(jnp.float32(dims[i]))
        w = jax.random.uniform(kw, (dims[i], dims[i + 1]), jnp.float32, -bound, bound)
        b = jax.random.uniform(kb, (1, dims[i + 1]), jnp.float32, -bound, bound)
        params.append((w, b))
    return params


def distance_reference(a, b, params):
    """Pure-JAX f32 reference with exact PyTorch-module semantics."""
    a32 = a.astype(jnp.float32)
    b32 = b.astype(jnp.float32)
    x = jnp.sum((a32[:, None, :] - b32[None, :, :]) ** 2, axis=2)
    for i, (w, bias) in enumerate(params):
        x = x @ w + bias
        if i < len(params) - 1:
            x = jnp.maximum(x, 0.0)
    return x


if __name__ == "__main__":
    key = jax.random.PRNGKey(0)

    # Small, module-consistent shapes: in_channel = out_channel = 5 (module
    # defaults), hid_channel kept small for a compact synthetic MLP.
    in_channel = 5
    out_channel = 5
    hid_channel = 32
    n, d = 8, 16

    key, ka, kb, kp = jax.random.split(key, 4)
    a = jax.random.normal(ka, (n, d), jnp.float32)
    b = jax.random.normal(kb, (in_channel, d), jnp.float32)
    params = init_params(kp, in_channel=in_channel, out_channel=out_channel,
                         hid_channel=hid_channel)

    ref = distance_reference(a, b, params)
    scale = float(jnp.max(jnp.abs(ref)))

    # Production bf16-MXU path (scale-aware tolerance for the fused bf16 math).
    out = jax.block_until_ready(
        distance_forward(a, b, params, out_channel=out_channel))
    assert out.shape == (n, out_channel)
    assert bool(jnp.all(jnp.isfinite(out)))
    err = float(jnp.max(jnp.abs(out - ref)))
    assert err <= 8e-2 * scale + 2e-2, (err, scale)

    # f32 debug/accuracy path (v7x emulates f32 matmuls; bf16 is production).
    out_f32 = jax.block_until_ready(
        distance_forward(a, b, params, out_channel=out_channel, use_bf16=False))
    err_f32 = float(jnp.max(jnp.abs(out_f32 - ref)))
    assert out_f32.shape == (n, out_channel)
    assert err_f32 <= 8e-2 * scale + 2e-2, (err_f32, scale)

    print("KERNEL_OK")
</pallas_src>

<mosaic_0001>
module attributes {stable_mosaic.version = 11 : i64} {
  func.func @_k(%arg0: i32, %arg1: memref<8x128xf32, #tpu.memory_space<vmem>>, %arg2: memref<8x128xf32, #tpu.memory_space<vmem>>, %arg3: memref<8x128xf32, #tpu.memory_space<vmem>>) attributes {dimension_semantics = [#tpu.dimension_semantics<arbitrary>], iteration_bounds = array<i64: 2>, scalar_prefetch = 0 : i64, scratch_operands = 0 : i64, tpu.core_type = #tpu.core_type<tc>, window_params = [{transform_indices = @transform_0, window_bounds = array<i64: 8, 128>}, {pipeline_mode = #tpu.pipeline_mode<synchronous>, transform_indices = @transform_1, window_bounds = array<i64: 8, 128>}, {transform_indices = @transform_2, window_bounds = array<i64: 8, 128>}]} {
    %c0 = arith.constant 0 : index
    %c0_0 = arith.constant 0 : index
    %0 = vector.load %arg1[%c0, %c0_0] : memref<8x128xf32, #tpu.memory_space<vmem>>, vector<8x128xf32>
    %c0_1 = arith.constant 0 : index
    %c0_2 = arith.constant 0 : index
    %1 = vector.load %arg2[%c0_1, %c0_2] : memref<8x128xf32, #tpu.memory_space<vmem>>, vector<8x128xf32>
    %2 = arith.addf %0, %1 : vector<8x128xf32>
    %c0_3 = arith.constant 0 : index
    %c0_4 = arith.constant 0 : index
    %3 = vector.load %arg3[%c0_3, %c0_4] : memref<8x128xf32, #tpu.memory_space<vmem>>, vector<8x128xf32>
    tpu.vector_store %arg3[%c0_3, %c0_4], %2 {strides = array<i32>} : memref<8x128xf32, #tpu.memory_space<vmem>>, vector<8x128xf32>,
    return
  }
  func.func @transform_0(%arg0: i32) -> (i32, i32) {
    %c0_i32 = arith.constant 0 : i32
    %c0_i32_0 = arith.constant 0 : i32
    return %arg0, %c0_i32 : i32, i32
  }
  func.func @transform_1(%arg0: i32) -> (i32, i32) {
    %c0_i32 = arith.constant 0 : i32
    %c0_i32_0 = arith.constant 0 : i32
    %c0_i32_1 = arith.constant 0 : i32
    return %c0_i32, %c0_i32_0 : i32, i32
  }
  func.func @transform_2(%arg0: i32) -> (i32, i32) {
    %c0_i32 = arith.constant 0 : i32
    %c0_i32_0 = arith.constant 0 : i32
    return %arg0, %c0_i32 : i32, i32
  }
}

module attributes {stable_mosaic.version = 11 : i64} {
  func.func @_distance_mlp_kernel(%arg0: i32, %arg1: memref<8x24xbf16, #tpu.memory_space<vmem>>, %arg2: memref<24x128xbf16, #tpu.memory_space<vmem>>, %arg3: memref<128x128xbf16, #tpu.memory_space<vmem>>, %arg4: memref<128x128xbf16, #tpu.memory_space<vmem>>, %arg5: memref<128x128xbf16, #tpu.memory_space<vmem>>, %arg6: memref<128x128xbf16, #tpu.memory_space<vmem>>, %arg7: memref<128x128xbf16, #tpu.memory_space<vmem>>, %arg8: memref<8x128xf32, #tpu.memory_space<vmem>>, %arg9: memref<8x128xf32, #tpu.memory_space<vmem>>) attributes {dimension_semantics = [#tpu.dimension_semantics<parallel>], iteration_bounds = array<i64: 1>, scalar_prefetch = 0 : i64, scratch_operands = 0 : i64, tpu.core_type = #tpu.core_type<tc>, window_params = [{transform_indices = @transform_0, window_bounds = array<i64: 8, 24>}, {pipeline_mode = #tpu.pipeline_mode<synchronous>, transform_indices = @transform_1, window_bounds = array<i64: 24, 128>}, {pipeline_mode = #tpu.pipeline_mode<synchronous>, transform_indices = @transform_2, window_bounds = array<i64: 128, 128>}, {pipeline_mode = #tpu.pipeline_mode<synchronous>, transform_indices = @transform_3, window_bounds = array<i64: 128, 128>}, {pipeline_mode = #tpu.pipeline_mode<synchronous>, transform_indices = @transform_4, window_bounds = array<i64: 128, 128>}, {pipeline_mode = #tpu.pipeline_mode<synchronous>, transform_indices = @transform_5, window_bounds = array<i64: 128, 128>}, {pipeline_mode = #tpu.pipeline_mode<synchronous>, transform_indices = @transform_6, window_bounds = array<i64: 128, 128>}, {pipeline_mode = #tpu.pipeline_mode<synchronous>, transform_indices = @transform_7, window_bounds = array<i64: 8, 128>}, {transform_indices = @transform_8, window_bounds = array<i64: 8, 128>}]} {
    %c0 = arith.constant 0 : index
    %c0_0 = arith.constant 0 : index
    %0 = vector.load %arg1[%c0, %c0_0] : memref<8x24xbf16, #tpu.memory_space<vmem>>, vector<8x24xbf16>
    %c0_1 = arith.constant 0 : index
    %c0_2 = arith.constant 0 : index
    %1 = vector.load %arg2[%c0_1, %c0_2] : memref<24x128xbf16, #tpu.memory_space<vmem>>, vector<24x128xbf16>
    %cst = arith.constant dense<0.000000e+00> : vector<8x128xf32>
    %2 = tpu.matmul %0, %1, %cst {dimension_numbers = #tpu.dot_dimension_numbers<[1], [0], [0], [1], [0, 0, 1, 1], [], []>} : vector<8x24xbf16>, vector<24x128xbf16>, vector<8x128xf32> -> vector<8x128xf32>
    %cst_3 = arith.constant 0.000000e+00 : f32
    %3 = vector.broadcast %cst_3 : f32 to vector<8x128xf32>
    %4 = arith.maximumf %2, %3 : vector<8x128xf32>
    %5 = arith.truncf %4 : vector<8x128xf32> to vector<8x128xbf16>
    %c0_4 = arith.constant 0 : index
    %c0_5 = arith.constant 0 : index
    %6 = vector.load %arg3[%c0_4, %c0_5] : memref<128x128xbf16, #tpu.memory_space<vmem>>, vector<128x128xbf16>
    %cst_6 = arith.constant dense<0.000000e+00> : vector<8x128xf32>
    %7 = tpu.matmul %5, %6, %cst_6 {dimension_numbers = #tpu.dot_dimension_numbers<[1], [0], [0], [1], [0, 0, 1, 1], [], []>} : vector<8x128xbf16>, vector<128x128xbf16>, vector<8x128xf32> -> vector<8x128xf32>
    %c0_7 = arith.constant 0 : index
    %c0_8 = arith.constant 0 : index
    %8 = vector.load %arg8[%c0_7, %c0_8] : memref<8x128xf32, #tpu.memory_space<vmem>>, vector<1x128xf32>
    %9 = vector.broadcast %8 : vector<1x128xf32> to vector<8x128xf32>
    %10 = arith.addf %7, %9 : vector<8x128xf32>
    %cst_9 = arith.constant 0.000000e+00 : f32
    %11 = vector.broadcast %cst_9 : f32 to vector<8x128xf32>
    %12 = arith.maximumf %10, %11 : vector<8x128xf32>
    %13 = arith.truncf %12 : vector<8x128xf32> to vector<8x128xbf16>
    %c0_10 = arith.constant 0 : index
    %c0_11 = arith.constant 0 : index
    %14 = vector.load %arg4[%c0_10, %c0_11] : memref<128x128xbf16, #tpu.memory_space<vmem>>, vector<128x128xbf16>
    %cst_12 = arith.constant dense<0.000000e+00> : vector<8x128xf32>
    %15 = tpu.matmul %13, %14, %cst_12 {dimension_numbers = #tpu.dot_dimension_numbers<[1], [0], [0], [1], [0, 0, 1, 1], [], []>} : vector<8x128xbf16>, vector<128x128xbf16>, vector<8x128xf32> -> vector<8x128xf32>
    %c1 = arith.constant 1 : index
    %c0_13 = arith.constant 0 : index
    %16 = vector.load %arg8[%c1, %c0_13] : memref<8x128xf32, #tpu.memory_space<vmem>>, vector<1x128xf32>
    %17 = vector.broadcast %16 : vector<1x128xf32> to vector<8x128xf32>
    %18 = arith.addf %15, %17 : vector<8x128xf32>
    %cst_14 = arith.constant 0.000000e+00 : f32
    %19 = vector.broadcast %cst_14 : f32 to vector<8x128xf32>
    %20 = arith.maximumf %18, %19 : vector<8x128xf32>
    %21 = arith.truncf %20 : vector<8x128xf32> to vector<8x128xbf16>
    %c0_15 = arith.constant 0 : index
    %c0_16 = arith.constant 0 : index
    %22 = vector.load %arg5[%c0_15, %c0_16] : memref<128x128xbf16, #tpu.memory_space<vmem>>, vector<128x128xbf16>
    %cst_17 = arith.constant dense<0.000000e+00> : vector<8x128xf32>
    %23 = tpu.matmul %21, %22, %cst_17 {dimension_numbers = #tpu.dot_dimension_numbers<[1], [0], [0], [1], [0, 0, 1, 1], [], []>} : vector<8x128xbf16>, vector<128x128xbf16>, vector<8x128xf32> -> vector<8x128xf32>
    %c2 = arith.constant 2 : index
    %c0_18 = arith.constant 0 : index
    %24 = vector.load %arg8[%c2, %c0_18] : memref<8x128xf32, #tpu.memory_space<vmem>>, vector<1x128xf32>
    %25 = vector.broadcast %24 : vector<1x128xf32> to vector<8x128xf32>
    %26 = arith.addf %23, %25 : vector<8x128xf32>
    %cst_19 = arith.constant 0.000000e+00 : f32
    %27 = vector.broadcast %cst_19 : f32 to vector<8x128xf32>
    %28 = arith.maximumf %26, %27 : vector<8x128xf32>
    %29 = arith.truncf %28 : vector<8x128xf32> to vector<8x128xbf16>
    %c0_20 = arith.constant 0 : index
    %c0_21 = arith.constant 0 : index
    %30 = vector.load %arg6[%c0_20, %c0_21] : memref<128x128xbf16, #tpu.memory_space<vmem>>, vector<128x128xbf16>
    %cst_22 = arith.constant dense<0.000000e+00> : vector<8x128xf32>
    %31 = tpu.matmul %29, %30, %cst_22 {dimension_numbers = #tpu.dot_dimension_numbers<[1], [0], [0], [1], [0, 0, 1, 1], [], []>} : vector<8x128xbf16>, vector<128x128xbf16>, vector<8x128xf32> -> vector<8x128xf32>
    %c3 = arith.constant 3 : index
    %c0_23 = arith.constant 0 : index
    %32 = vector.load %arg8[%c3, %c0_23] : memref<8x128xf32, #tpu.memory_space<vmem>>, vector<1x128xf32>
    %33 = vector.broadcast %32 : vector<1x128xf32> to vector<8x128xf32>
    %34 = arith.addf %31, %33 : vector<8x128xf32>
    %cst_24 = arith.constant 0.000000e+00 : f32
    %35 = vector.broadcast %cst_24 : f32 to vector<8x128xf32>
    %36 = arith.maximumf %34, %35 : vector<8x128xf32>
    %37 = arith.truncf %36 : vector<8x128xf32> to vector<8x128xbf16>
    %c0_25 = arith.constant 0 : index
    %c0_26 = arith.constant 0 : index
    %38 = vector.load %arg7[%c0_25, %c0_26] : memref<128x128xbf16, #tpu.memory_space<vmem>>, vector<128x128xbf16>
    %cst_27 = arith.constant dense<0.000000e+00> : vector<8x128xf32>
    %39 = tpu.matmul %37, %38, %cst_27 {dimension_numbers = #tpu.dot_dimension_numbers<[1], [0], [0], [1], [0, 0, 1, 1], [], []>} : vector<8x128xbf16>, vector<128x128xbf16>, vector<8x128xf32> -> vector<8x128xf32>
    %c4 = arith.constant 4 : index
    %c0_28 = arith.constant 0 : index
    %40 = vector.load %arg8[%c4, %c0_28] : memref<8x128xf32, #tpu.memory_space<vmem>>, vector<1x128xf32>
    %41 = vector.broadcast %40 : vector<1x128xf32> to vector<8x128xf32>
    %42 = arith.addf %39, %41 : vector<8x128xf32>
    %c0_29 = arith.constant 0 : index
    %c0_30 = arith.constant 0 : index
    %43 = vector.load %arg9[%c0_29, %c0_30] : memref<8x128xf32, #tpu.memory_space<vmem>>, vector<8x128xf32>
    tpu.vector_store %arg9[%c0_29, %c0_30], %42 {strides = array<i32>} : memref<8x128xf32, #tpu.memory_space<vmem>>, vector<8x128xf32>,
    return
  }
  func.func @transform_0(%arg0: i32) -> (i32, i32) {
    %c0_i32 = arith.constant 0 : i32
    %c0_i32_0 = arith.constant 0 : i32
    return %arg0, %c0_i32 : i32, i32
  }
  func.func @transform_1(%arg0: i32) -> (i32, i32) {
    %c0_i32 = arith.constant 0 : i32
    %c0_i32_0 = arith.constant 0 : i32
    %c0_i32_1 = arith.constant 0 : i32
    return %c0_i32, %c0_i32_0 : i32, i32
  }
  func.func @transform_2(%arg0: i32) -> (i32, i32) {
    %c0_i32 = arith.constant 0 : i32
    %c0_i32_0 = arith.constant 0 : i32
    %c0_i32_1 = arith.constant 0 : i32
    return %c0_i32, %c0_i32_0 : i32, i32
  }
  func.func @transform_3(%arg0: i32) -> (i32, i32) {
    %c0_i32 = arith.constant 0 : i32
    %c0_i32_0 = arith.constant 0 : i32
    %c0_i32_1 = arith.constant 0 : i32
    return %c0_i32, %c0_i32_0 : i32, i32
  }
  func.func @transform_4(%arg0: i32) -> (i32, i32) {
    %c0_i32 = arith.constant 0 : i32
    %c0_i32_0 = arith.constant 0 : i32
    %c0_i32_1 = arith.constant 0 : i32
    return %c0_i32, %c0_i32_0 : i32, i32
  }
  func.func @transform_5(%arg0: i32) -> (i32, i32) {
    %c0_i32 = arith.constant 0 : i32
    %c0_i32_0 = arith.constant 0 : i32
    %c0_i32_1 = arith.constant 0 : i32
    return %c0_i32, %c0_i32_0 : i32, i32
  }
  func.func @transform_6(%arg0: i32) -> (i32, i32) {
    %c0_i32 = arith.constant 0 : i32
    %c0_i32_0 = arith.constant 0 : i32
    %c0_i32_1 = arith.constant 0 : i32
    return %c0_i32, %c0_i32_0 : i32, i32
  }
  func.func @transform_7(%arg0: i32) -> (i32, i32) {
    %c0_i32 = arith.constant 0 : i32
    %c0_i32_0 = arith.constant 0 : i32
    %c0_i32_1 = arith.constant 0 : i32
    return %c0_i32, %c0_i32_0 : i32, i32
  }
  func.func @transform_8(%arg0: i32) -> (i32, i32) {
    %c0_i32 = arith.constant 0 : i32
    %c0_i32_0 = arith.constant 0 : i32
    return %arg0, %c0_i32 : i32, i32
  }
}

</mosaic_0001>

<llo_original>
// kernel: tpu_custom_call.1
$region0: #{tpu_custom_call.1}
  #allocation0 [shape = 'u32[]', space=smem, size = 0x4, offset = 0x4, fixed_abs, tag = 'smem constant byte address 0x4 - core index']
  #allocation1 [shape = 'u32[144,128]{1,0:T(1,128)}', space=vmem, size = 0x12000, scoped, tag = 'internal scratch']
  %s0 = inlined_call_operand.hbm [shape: f32[16,128], index: 0, kind: input, shape index: {}]
  %s1 = inlined_call_operand.hbm [shape: f32[8,128], index: 1, kind: input, shape index: {}]
  %s2 = inlined_call_operand.hbm [shape: f32[16,128], index: 2, kind: output, shape index: {}]
  %s3 = sld [smem:[#allocation0]]
  $region49: #{tpu_custom_call.1} parent=0
    _
  %s5 = ssub.s32 1, %s3
  %s6 = scalar_select 0, %s5, %s3
  $region1: #{tpu_custom_call.1} parent=0
    #allocation2 [shape = 'u8[8192]{0}', space=vmem, size = 0x2000, scoped, tag = 'input window, operand 0']
    #allocation3 [shape = 's32[2]{0}', space=sflag, size = 0x8, scoped, tag = 'scoped memory for tpu_custom_call.1']
    #allocation4 [shape = 's32[2]{0}', space=sflag, size = 0x8, scoped, tag = 'scoped memory for tpu_custom_call.1']
    #allocation5 [shape = 'u8[4096]{0}', space=vmem, size = 0x1000, scoped, tag = 'input window, operand 1, single buffered']
    #allocation6 [shape = 's32[1]{0}', space=sflag, size = 0x4, scoped, tag = 'scoped memory for tpu_custom_call.1']
    #allocation7 [shape = 'u8[8192]{0}', space=vmem, size = 0x2000, scoped, tag = 'output window, operand 0']
    %7 = vsyncpa [#allocation3], 0
    %s8 = scalar_lea.sflag [#allocation3], 1
    %9 = vsyncpa %s8, 0
    %10 = vsyncpa [#allocation6], 0
    %11 = vsyncpa [#allocation4], 0
    %s12 = scalar_lea.sflag [#allocation4], 1
    %13 = vsyncpa %s12, 0
    loop: start=0, step=1, limit=4
    $region2: #{tpu_custom_call.1} parent=1 // loop_pre_header
      _
    $region3: #{tpu_custom_call.1} parent=1 // loop_header
      %s15 = sphi 0, %s19
      %p16 = scmp.ge.s32.totalorder %s15, 4
      %s25 = sphi 0, %s27
      %s28 = sphi 0, %s25
      %s29 = sphi 0, %s28
      %s45 = sphi 0, %s29
      %s49 = sphi 0, %s49
      %s51 = sphi 0, %s49
      %s52 = sphi 0, %s51
      %s66 = sphi 0, %s52
      %s72 = sphi 0, %s74
      %s75 = sphi 0, %s72
      %s76 = sphi 0, %s75
      %s92 = sphi 0, %s76
    $region4: #{tpu_custom_call.1} parent=1 // loop_header_branch
      %18 = sbr.rel (%p16) target = $region8
    $region5: #{tpu_custom_call.1} parent=1 // loop_body
      %s20 = ssub.s32 %s15, 1
      %s21 = ssub.s32 %s15, 2
      %s22 = sadd.s32 %s15, 1
      %s23 = ssub.s32 %s15, %s22
      %p24 = scmp.eq.s32.totalorder %s23, 0
      %s26 = sadd.s32 %s25, 1
      %s27 = scalar_select %p24, %s25, %s26
      %p30 = pneg %p24
      %p31 = scmp.eq.s32.totalorder %s15, 1
      %p32 = por %p30, %p31
      %p33 = scmp.ne.s32.totalorder %s25, %s28
      %p34 = scmp.eq.s32.totalorder %s15, 0
      %p35 = por %p33, %p34
      %p36 = scmp.ne.s32.totalorder %s25, %s28
      %p37 = scmp.eq.s32.totalorder %s20, 1
      %p38 = por %p36, %p37
      %p39 = scmp.ne.s32.totalorder %s28, %s29
      %p40 = scmp.eq.s32.totalorder %s20, 0
      %p41 = por %p39, %p40
      %p42 = scmp.ne.s32.totalorder %s28, %s29
      %p43 = scmp.eq.s32.totalorder %s21, 1
      %p44 = por %p42, %p43
      %p46 = scmp.ne.s32.totalorder %s29, %s45
      %p47 = scmp.eq.s32.totalorder %s21, 0
      %p48 = por %p46, %p47
      %s50 = sadd.s32 %s49, 1
      %p53 = scmp.eq.s32.totalorder %s15, 1
      %p54 = scmp.ne.s32.totalorder %s49, %s51
      %p55 = scmp.eq.s32.totalorder %s15, 0
      %p56 = por %p54, %p55
      %p57 = scmp.ne.s32.totalorder %s49, %s51
      %p58 = scmp.eq.s32.totalorder %s20, 1
      %p59 = por %p57, %p58
      %p60 = scmp.ne.s32.totalorder %s51, %s52
      %p61 = scmp.eq.s32.totalorder %s20, 0
      %p62 = por %p60, %p61
      %p63 = scmp.ne.s32.totalorder %s51, %s52
      %p64 = scmp.eq.s32.totalorder %s21, 1
      %p65 = por %p63, %p64
      %p67 = scmp.ne.s32.totalorder %s52, %s66
      %p68 = scmp.eq.s32.totalorder %s21, 0
      %p69 = por %p67, %p68
      %s70 = ssub.s32 %s15, %s22
      %p71 = scmp.eq.s32.totalorder %s70, 0
      %s73 = sadd.s32 %s72, 1
      %s74 = scalar_select %p71, %s72, %s73
      %p77 = pneg %p71
      %p78 = scmp.eq.s32.totalorder %s15, 1
      %p79 = por %p77, %p78
      %p80 = scmp.ne.s32.totalorder %s72, %s75
      %p81 = scmp.eq.s32.totalorder %s15, 0
      %p82 = por %p80, %p81
      %p83 = scmp.ne.s32.totalorder %s72, %s75
      %p84 = scmp.eq.s32.totalorder %s20, 1
      %p85 = por %p83, %p84
      %p86 = scmp.ne.s32.totalorder %s75, %s76
      %p87 = scmp.eq.s32.totalorder %s20, 0
      %p88 = por %p86, %p87
      %p89 = scmp.ne.s32.totalorder %s75, %s76
      %p90 = scmp.eq.s32.totalorder %s21, 1
      %p91 = por %p89, %p90
      %p93 = scmp.ne.s32.totalorder %s76, %s92
      %p94 = scmp.eq.s32.totalorder %s21, 0
      %p95 = por %p93, %p94
      %p96 = scmp.le.s32.totalorder 1, %s15
      %p97 = scmp.lt.s32.totalorder %s15, 3
      %p98 = pnand %p96, %p97
      %p99 = pneg %p98
      // Predicated region
      $region9: #{tpu_custom_call.1} parent=5 // pred_check
        _
      $region10: #{tpu_custom_call.1} parent=5 // pred_check_branch
        %101 = sbr.rel (%p98) target = $region12
      $region11: #{tpu_custom_call.1} parent=5 // pred_region
        %s102 = ssub.s32 %s15, 1
        // Predicated region
        $region13: #{tpu_custom_call.1} parent=11 // pred_check
          %p103 = pneg %p62
        $region14: #{tpu_custom_call.1} parent=11 // pred_check_branch
          %105 = sbr.rel (%p103) target = $region16
        $region15: #{tpu_custom_call.1} parent=11 // pred_region
          %s107 = ssub.s32 128, 128
          %108 = vsyncadd [#allocation6], %s107
          %s110 = sshll.u32 [#allocation5], 4
          %s111 = int_to_ptr.vmem [resolvable:$true] %s110
          %113 = dma.hbm_to_vmem [thread:$0]  %s1, 128, %s111, [#allocation6]
        $region16: #{tpu_custom_call.1} parent=11 // pred_fallthru
          _
      $region12: #{tpu_custom_call.1} parent=5 // pred_fallthru
        _
      %p114 = scmp.lt.s32.totalorder %s15, 2
      // Predicated region
      $region17: #{tpu_custom_call.1} parent=5 // pred_check
        %p115 = pneg %p114
      $region18: #{tpu_custom_call.1} parent=5 // pred_check_branch
        %117 = sbr.rel (%p115) target = $region20
      $region19: #{tpu_custom_call.1} parent=5 // pred_region
        // Predicated region
        $region21: #{tpu_custom_call.1} parent=19 // pred_check
          %p118 = pneg %p35
        $region22: #{tpu_custom_call.1} parent=19 // pred_check_branch
          %120 = sbr.rel (%p118) target = $region24
        $region23: #{tpu_custom_call.1} parent=19 // pred_region
          %s121 = sand.u32 %s25, 1
          %s122 = scalar_lea.sflag [#allocation3], %s121
          %s123 = sand.u32 %s25, 1
          %s124 = smul.addr %s123, 8
          %s125 = scalar_lea.vmem [#allocation2], %s124
          %s127 = ssub.s32 128, 128
          %128 = vsyncadd %s122, %s127
          %s129 = smul.addr %s15, 128
          %s130 = scalar_lea.hbm %s0, %s129
          %s132 = sshll.u32 %s125, 4
          %s133 = int_to_ptr.vmem [resolvable:$true] %s132
          %135 = dma.hbm_to_vmem [thread:$0]  %s130, 128, %s133, %s122
        $region24: #{tpu_custom_call.1} parent=19 // pred_fallthru
          _
      $region20: #{tpu_custom_call.1} parent=5 // pred_fallthru
        _
      %p136 = scmp.le.s32.totalorder 1, %s15
      %p137 = scmp.lt.s32.totalorder %s15, 3
      %p138 = pnand %p136, %p137
      %p139 = pneg %p138
      // Predicated region
      $region25: #{tpu_custom_call.1} parent=5 // pred_check
        _
      $region26: #{tpu_custom_call.1} parent=5 // pred_check_branch
        %141 = sbr.rel (%p138) target = $region28
      $region27: #{tpu_custom_call.1} parent=5 // pred_region
        %s142 = ssub.s32 %s15, 1
        %s143 = sand.u32 %s28, 1
        %s144 = scalar_lea.sflag [#allocation3], %s143
        %s145 = sand.u32 %s28, 1
        %s146 = smul.addr %s145, 8
        %s147 = scalar_lea.vmem [#allocation2], %s146
        // Predicated region
        $region29: #{tpu_custom_call.1} parent=27 // pred_check
          %p148 = pneg %p41
        $region30: #{tpu_custom_call.1} parent=27 // pred_check_branch
          %150 = sbr.rel (%p148) target = $region32
        $region31: #{tpu_custom_call.1} parent=27 // pred_region
          %151 = dma.done %s144, 128
        $region32: #{tpu_custom_call.1} parent=27 // pred_fallthru
          _
        // Predicated region
        $region33: #{tpu_custom_call.1} parent=27 // pred_check
          %p152 = pneg %p62
        $region34: #{tpu_custom_call.1} parent=27 // pred_check_branch
          %154 = sbr.rel (%p152) target = $region36
        $region35: #{tpu_custom_call.1} parent=27 // pred_region
          %155 = dma.done [#allocation6], 128
        $region36: #{tpu_custom_call.1} parent=27 // pred_fallthru
          _
        %s156 = sand.u32 %s28, 1
        %s157 = scalar_lea.sflag [#allocation3], %s156
        %s158 = sand.u32 %s28, 1
        %s159 = smul.addr %s158, 8
        %s160 = scalar_lea.vmem [#allocation2], %s159
        %p161 = pneg %p41
        %p162 = pneg %p38
        %p163 = pneg %p62
        %p164 = pneg %p59
        %p165 = pneg %p88
        %p166 = pneg %p85
        %s167 = sand.u32 %s75, 1
        %s168 = scalar_lea.sflag [#allocation4], %s167
        %s169 = sand.u32 %s75, 1
        %s170 = smul.addr %s169, 8
        %s171 = scalar_lea.vmem [#allocation7], %s170
        %v172 = vld [vmem:[%s147] sm:$0xff]
        %v173 = vld [vmem:[#allocation5] sm:$0xff]
        %v174 = vadd.f32 %v172, %v173
        %175 = vst [vmem:[%s171] sm:$0xff] %v174
        %s176 = sand.u32 %s75, 1
        %s177 = scalar_lea.sflag [#allocation4], %s176
        %s178 = sand.u32 %s75, 1
        %s179 = smul.addr %s178, 8
        %s180 = scalar_lea.vmem [#allocation7], %s179
        // Predicated region
        $region37: #{tpu_custom_call.1} parent=27 // pred_check
          %p181 = pneg %p85
        $region38: #{tpu_custom_call.1} parent=27 // pred_check_branch
          %183 = sbr.rel (%p181) target = $region40
        $region39: #{tpu_custom_call.1} parent=27 // pred_region
          %s185 = ssub.s32 128, 128
          %186 = vsyncadd %s177, %s185
          %s187 = smul.addr %s20, 128
          %s188 = scalar_lea.hbm %s2, %s187
          %s190 = sshll.u32 %s180, 4
          %s191 = int_to_ptr.vmem [resolvable:$true] %s190
          %193 = dma.vmem_to_hbm [thread:$0]  %s191, 128, %s188, %s177
        $region40: #{tpu_custom_call.1} parent=27 // pred_fallthru
          _
      $region28: #{tpu_custom_call.1} parent=5 // pred_fallthru
        _
      %p194 = scmp.le.s32.totalorder 2, %s15
      // Predicated region
      $region41: #{tpu_custom_call.1} parent=5 // pred_check
        %p195 = pneg %p194
      $region42: #{tpu_custom_call.1} parent=5 // pred_check_branch
        %197 = sbr.rel (%p195) target = $region44
      $region43: #{tpu_custom_call.1} parent=5 // pred_region
        %s198 = ssub.s32 %s15, 2
        // Predicated region
        $region45: #{tpu_custom_call.1} parent=43 // pred_check
          %p199 = pneg %p91
        $region46: #{tpu_custom_call.1} parent=43 // pred_check_branch
          %201 = sbr.rel (%p199) target = $region48
        $region47: #{tpu_custom_call.1} parent=43 // pred_region
          %s202 = sand.u32 %s76, 1
          %s203 = scalar_lea.sflag [#allocation4], %s202
          %s204 = sand.u32 %s76, 1
          %s205 = smul.addr %s204, 8
          %s206 = scalar_lea.vmem [#allocation7], %s205
          %207 = dma.done %s203, 128
        $region48: #{tpu_custom_call.1} parent=43 // pred_fallthru
          _
      $region44: #{tpu_custom_call.1} parent=5 // pred_fallthru
        _
    $region6: #{tpu_custom_call.1} parent=1 // loop_footer
      %s19 = sadd.s32 1, %s15
    $region7: #{tpu_custom_call.1} parent=1 // loop_footer_branch
      %14 = sbr.rel target = $region3
    $region8: #{tpu_custom_call.1} parent=1 // loop_exit
      _
    %208 = vsyncpa [#allocation3], 1
    %s209 = scalar_lea.sflag [#allocation3], 1
    %210 = vsyncpa %s209, 1
    %211 = vsyncpa [#allocation6], 1
    %212 = vsyncpa [#allocation4], 1
    %s213 = scalar_lea.sflag [#allocation4], 1
    %214 = vsyncpa %s213, 1

// kernel: _distance_forward_impl.1
$region0: #{_distance_forward_impl.1}
  #allocation0 [shape = 'u32[]', space=smem, size = 0x4, offset = 0x4, fixed_abs, tag = 'smem constant byte address 0x4 - core index']
  #allocation1 [shape = 'u32[144,128]{1,0:T(1,128)}', space=vmem, size = 0x12000, scoped, tag = 'internal scratch']
  %s0 = inlined_call_operand.vmem [shape: bf16[8,24], index: 0, kind: input, shape index: {}]
  %s1 = inlined_call_operand.vmem [shape: bf16[24,128], index: 1, kind: input, shape index: {}]
  %s2 = inlined_call_operand.vmem [shape: bf16[128,128], index: 2, kind: input, shape index: {}]
  %s3 = inlined_call_operand.vmem [shape: bf16[128,128], index: 3, kind: input, shape index: {}]
  %s4 = inlined_call_operand.vmem [shape: bf16[128,128], index: 4, kind: input, shape index: {}]
  %s5 = inlined_call_operand.vmem [shape: bf16[128,128], index: 5, kind: input, shape index: {}]
  %s6 = inlined_call_operand.vmem [shape: bf16[128,128], index: 6, kind: input, shape index: {}]
  %s7 = inlined_call_operand.vmem [shape: f32[8,128], index: 7, kind: input, shape index: {}]
  %s8 = inlined_call_operand.hbm [shape: f32[8,128], index: 8, kind: output, shape index: {}]
  %s9 = sld [smem:[#allocation0]]
  $region42: #{_distance_forward_impl.1} parent=0
    _
  %s11 = ssub.s32 1, %s9
  %s12 = scalar_select 0, %s11, %s9
  $region1: #{_distance_forward_impl.1} parent=0
    #allocation2 [shape = 'u8[4096]{0}', space=vmem, size = 0x1000, scoped, tag = 'output window, operand 0, single buffered']
    #allocation3 [shape = 's32[1]{0}', space=sflag, size = 0x4, scoped, tag = 'scoped memory for _distance_forward_impl.1']
    %13 = vsyncpa [#allocation3], 0
    // Predicated region
    $region2: #{_distance_forward_impl.1} parent=1 // pred_check
      _
    $region3: #{_distance_forward_impl.1} parent=1 // pred_check_branch
      %15 = sbr.rel (0) target = $region5
    $region4: #{_distance_forward_impl.1} parent=1 // pred_region
      _
    $region5: #{_distance_forward_impl.1} parent=1 // pred_fallthru
      _
    // Predicated region
    $region6: #{_distance_forward_impl.1} parent=1 // pred_check
      _
    $region7: #{_distance_forward_impl.1} parent=1 // pred_check_branch
      %17 = sbr.rel (0) target = $region9
    $region8: #{_distance_forward_impl.1} parent=1 // pred_region
      _
    $region9: #{_distance_forward_impl.1} parent=1 // pred_fallthru
      _
    // Predicated region
    $region10: #{_distance_forward_impl.1} parent=1 // pred_check
      _
    $region11: #{_distance_forward_impl.1} parent=1 // pred_check_branch
      %19 = sbr.rel (0) target = $region13
    $region12: #{_distance_forward_impl.1} parent=1 // pred_region
      _
    $region13: #{_distance_forward_impl.1} parent=1 // pred_fallthru
      _
    // Predicated region
    $region14: #{_distance_forward_impl.1} parent=1 // pred_check
      _
    $region15: #{_distance_forward_impl.1} parent=1 // pred_check_branch
      %21 = sbr.rel (0) target = $region17
    $region16: #{_distance_forward_impl.1} parent=1 // pred_region
      _
    $region17: #{_distance_forward_impl.1} parent=1 // pred_fallthru
      _
    // Predicated region
    $region18: #{_distance_forward_impl.1} parent=1 // pred_check
      _
    $region19: #{_distance_forward_impl.1} parent=1 // pred_check_branch
      %23 = sbr.rel (0) target = $region21
    $region20: #{_distance_forward_impl.1} parent=1 // pred_region
      _
    $region21: #{_distance_forward_impl.1} parent=1 // pred_fallthru
      _
    // Predicated region
    $region22: #{_distance_forward_impl.1} parent=1 // pred_check
      _
    $region23: #{_distance_forward_impl.1} parent=1 // pred_check_branch
      %25 = sbr.rel (0) target = $region25
    $region24: #{_distance_forward_impl.1} parent=1 // pred_region
      _
    $region25: #{_distance_forward_impl.1} parent=1 // pred_fallthru
      _
    // Predicated region
    $region26: #{_distance_forward_impl.1} parent=1 // pred_check
      _
    $region27: #{_distance_forward_impl.1} parent=1 // pred_check_branch
      %27 = sbr.rel (0) target = $region29
    $region28: #{_distance_forward_impl.1} parent=1 // pred_region
      _
    $region29: #{_distance_forward_impl.1} parent=1 // pred_fallthru
      _
    // Predicated region
    $region30: #{_distance_forward_impl.1} parent=1 // pred_check
      _
    $region31: #{_distance_forward_impl.1} parent=1 // pred_check_branch
      %29 = sbr.rel (0) target = $region33
    $region32: #{_distance_forward_impl.1} parent=1 // pred_region
      _
    $region33: #{_distance_forward_impl.1} parent=1 // pred_fallthru
      _
    %v31 = vld [vmem:[%s0] sm:$0xf]
    %v32 = vld [vmem:[%s1] sm:$0xf]
    %v33 = vld [vmem:[%s1 + $0x4] sm:$0xf]
    %v34 = vld [vmem:[%s1 + $0x8] sm:$0xf]
    %v38 = vunpack.c.l.b16 %v32
    %v39 = vunpack.c.l.b16 %v33
    %v40 = vunpack.c.l.b16 %v34
    %v41 = vpack.c.b16 %v39, %v38
    %v42 = vpack.c.b16 %v40, %v40
    %vm44 = vcmask 195584
    %v46 = vsel %vm44, %v31, 0
    %vm48 = vcmask 1043456
    %v50 = vsel %vm48, %v42, 0
    %52 = vmatprep.subr.bf16.mxu0 0
    %53 = vmatpush1.bf16.msra.mxu0 0
    %54 = vmatprep.subr.bf16.mxu0 0
    %55 = vmatpush1.bf16.msra.mxu0 0
    %56 = vmatprep.subr.bf16.mxu0 0
    %57 = vmatpush1.bf16.msra.mxu0 0
    %58 = vmatprep.subr.bf16.mxu0 0
    %59 = vmatpush1.bf16.msra.mxu0 0
    %60 = vmatprep.subr.bf16.mxu0 0
    %61 = vmatpush1.bf16.msra.mxu0 0
    %62 = vmatprep.subr.bf16.mxu0 0
    %63 = vmatpush1.bf16.msra.mxu0 0
    %64 = vmatprep.subr.bf16.mxu0 0
    %65 = vmatpush1.bf16.msra.mxu0 %v50
    %66 = vmatprep.subr.bf16.mxu0 0
    %67 = vmatpush1.bf16.msra.mxu0 %v41
    %68 = vmatprep.subr.bf16.mxu0 0
    %69 = vmatpush2.bf16.msra.mxu0 0
    %70 = vmatprep.subr.bf16.mxu0 0
    %71 = vmatpush2.bf16.msra.mxu0 0
    %72 = vmatprep.subr.bf16.mxu0 0
    %73 = vmatpush2.bf16.msra.mxu0 0
    %74 = vmatprep.subr.bf16.mxu0 0
    %75 = vmatpush2.bf16.msra.mxu0 0
    %76 = vmatprep.subr.bf16.mxu0 0
    %77 = vmatpush2.bf16.msra.mxu0 0
    %78 = vmatprep.subr.bf16.mxu0 0
    %79 = vmatpush2.bf16.msra.mxu0 0
    %80 = vmatprep.subr.bf16.mxu0 0
    %81 = vmatpush2.bf16.msra.mxu0 0
    %82 = vmatprep.subr.bf16.mxu0 0
    %83 = vmatpush2.bf16.msra.mxu0 0
    %84 = vmatprep.mubr.bf16.mxu0 0
    %85 = vmatmul.mubr.bf16.gmra.mxu0 %v46
    %v86 = vpop.f32.mrf.mxu0
    %v87 = vadd.f32 0.0, %v86
    %v88 = vpop.f32.mrf.mxu0
    %v89 = vpop.f32.mrf.mxu0
    %v90 = vpop.f32.mrf.mxu0
    %91 = vdwg.mxu0
    %v92 = vmax.f32 %v87, 0.0
    %v93 = vpack.c.bf16 %v92, %v92
    %v94 = vld [vmem:[%s2] sm:$0xf]
    %v95 = vld [vmem:[%s2 + $0x4] sm:$0xf]
    %v96 = vld [vmem:[%s2 + $0x8] sm:$0xf]
    %v97 = vld [vmem:[%s2 + $0xc] sm:$0xf]
    %v98 = vld [vmem:[%s2 + $0x10] sm:$0xf]
    %v99 = vld [vmem:[%s2 + $0x14] sm:$0xf]
    %v100 = vld [vmem:[%s2 + $0x18] sm:$0xf]
    %v101 = vld [vmem:[%s2 + $0x1c] sm:$0xf]
    %v102 = vld [vmem:[%s2 + $0x20] sm:$0xf]
    %v103 = vld [vmem:[%s2 + $0x24] sm:$0xf]
    %v104 = vld [vmem:[%s2 + $0x28] sm:$0xf]
    %v105 = vld [vmem:[%s2 + $0x2c] sm:$0xf]
    %v106 = vld [vmem:[%s2 + $0x30] sm:$0xf]
    %v107 = vld [vmem:[%s2 + $0x34] sm:$0xf]
    %v108 = vld [vmem:[%s2 + $0x38] sm:$0xf]
    %v109 = vld [vmem:[%s2 + $0x3c] sm:$0xf]
    %v110 = vld [vmem:[%s7] sm:$0x1]
    %v111 = vlaneseq
    %v112 = vshrl.u32 %v111, 7
    %v113 = vsub.s32 0, %v112
    %v114 = vrot.slane %v110, %v113
    %v131 = vunpack.c.l.b16 %v94
    %v132 = vunpack.c.l.b16 %v95
    %v133 = vunpack.c.l.b16 %v96
    %v134 = vunpack.c.l.b16 %v97
    %v135 = vunpack.c.l.b16 %v98
    %v136 = vunpack.c.l.b16 %v99
    %v137 = vunpack.c.l.b16 %v100
    %v138 = vunpack.c.l.b16 %v101
    %v139 = vunpack.c.l.b16 %v102
    %v140 = vunpack.c.l.b16 %v103
    %v141 = vunpack.c.l.b16 %v104
    %v142 = vunpack.c.l.b16 %v105
    %v143 = vunpack.c.l.b16 %v106
    %v144 = vunpack.c.l.b16 %v107
    %v145 = vunpack.c.l.b16 %v108
    %v146 = vunpack.c.l.b16 %v109
    %v147 = vpack.c.b16 %v132, %v131
    %v148 = vpack.c.b16 %v134, %v133
    %v149 = vpack.c.b16 %v136, %v135
    %v150 = vpack.c.b16 %v138, %v137
    %v151 = vpack.c.b16 %v140, %v139
    %v152 = vpack.c.b16 %v142, %v141
    %v153 = vpack.c.b16 %v144, %v143
    %v154 = vpack.c.b16 %v146, %v145
    %163 = vmatprep.subr.bf16.mxu0 0
    %164 = vmatpush1.bf16.msra.mxu0 %v154
    %165 = vmatprep.subr.bf16.mxu0 0
    %166 = vmatpush1.bf16.msra.mxu0 %v153
    %167 = vmatprep.subr.bf16.mxu0 0
    %168 = vmatpush1.bf16.msra.mxu0 %v152
    %169 = vmatprep.subr.bf16.mxu0 0
    %170 = vmatpush1.bf16.msra.mxu0 %v151
    %171 = vmatprep.subr.bf16.mxu0 0
    %172 = vmatpush1.bf16.msra.mxu0 %v150
    %173 = vmatprep.subr.bf16.mxu0 0
    %174 = vmatpush1.bf16.msra.mxu0 %v149
    %175 = vmatprep.subr.bf16.mxu0 0
    %176 = vmatpush1.bf16.msra.mxu0 %v148
    %177 = vmatprep.subr.bf16.mxu0 0
    %178 = vmatpush1.bf16.msra.mxu0 %v147
    %179 = vmatprep.subr.bf16.mxu0 0
    %180 = vmatpush2.bf16.msra.mxu0 0
    %181 = vmatprep.subr.bf16.mxu0 0
    %182 = vmatpush2.bf16.msra.mxu0 0
    %183 = vmatprep.subr.bf16.mxu0 0
    %184 = vmatpush2.bf16.msra.mxu0 0
    %185 = vmatprep.subr.bf16.mxu0 0
    %186 = vmatpush2.bf16.msra.mxu0 0
    %187 = vmatprep.subr.bf16.mxu0 0
    %188 = vmatpush2.bf16.msra.mxu0 0
    %189 = vmatprep.subr.bf16.mxu0 0
    %190 = vmatpush2.bf16.msra.mxu0 0
    %191 = vmatprep.subr.bf16.mxu0 0
    %192 = vmatpush2.bf16.msra.mxu0 0
    %193 = vmatprep.subr.bf16.mxu0 0
    %194 = vmatpush2.bf16.msra.mxu0 0
    %195 = vmatprep.mubr.bf16.mxu0 0
    %196 = vmatmul.mubr.bf16.gmra.mxu0 %v93
    %v197 = vpop.f32.mrf.mxu0
    %v198 = vadd.f32 %v114, %v197
    %v199 = vpop.f32.mrf.mxu0
    %v200 = vpop.f32.mrf.mxu0
    %v201 = vpop.f32.mrf.mxu0
    %202 = vdwg.mxu0
    %v203 = vmax.f32 %v198, 0.0
    %v204 = vpack.c.bf16 %v203, %v203
    %v205 = vld [vmem:[%s3] sm:$0xf]
    %v206 = vld [vmem:[%s3 + $0x4] sm:$0xf]
    %v207 = vld [vmem:[%s3 + $0x8] sm:$0xf]
    %v208 = vld [vmem:[%s3 + $0xc] sm:$0xf]
    %v209 = vld [vmem:[%s3 + $0x10] sm:$0xf]
    %v210 = vld [vmem:[%s3 + $0x14] sm:$0xf]
    %v211 = vld [vmem:[%s3 + $0x18] sm:$0xf]
    %v212 = vld [vmem:[%s3 + $0x1c] sm:$0xf]
    %v213 = vld [vmem:[%s3 + $0x20] sm:$0xf]
    %v214 = vld [vmem:[%s3 + $0x24] sm:$0xf]
    %v215 = vld [vmem:[%s3 + $0x28] sm:$0xf]
    %v216 = vld [vmem:[%s3 + $0x2c] sm:$0xf]
    %v217 = vld [vmem:[%s3 + $0x30] sm:$0xf]
    %v218 = vld [vmem:[%s3 + $0x34] sm:$0xf]
    %v219 = vld [vmem:[%s3 + $0x38] sm:$0xf]
    %v220 = vld [vmem:[%s3 + $0x3c] sm:$0xf]
    %v221 = vld [vmem:[%s7 + $0x1] sm:$0x1]
    %v222 = vlaneseq
    %v223 = vshrl.u32 %v222, 7
    %v224 = vsub.s32 0, %v223
    %v225 = vrot.slane %v221, %v224
    %v242 = vunpack.c.l.b16 %v205
    %v243 = vunpack.c.l.b16 %v206
    %v244 = vunpack.c.l.b16 %v207
    %v245 = vunpack.c.l.b16 %v208
    %v246 = vunpack.c.l.b16 %v209
    %v247 = vunpack.c.l.b16 %v210
    %v248 = vunpack.c.l.b16 %v211
    %v249 = vunpack.c.l.b16 %v212
    %v250 = vunpack.c.l.b16 %v213
    %v251 = vunpack.c.l.b16 %v214
    %v252 = vunpack.c.l.b16 %v215
    %v253 = vunpack.c.l.b16 %v216
    %v254 = vunpack.c.l.b16 %v217
    %v255 = vunpack.c.l.b16 %v218
    %v256 = vunpack.c.l.b16 %v219
    %v257 = vunpack.c.l.b16 %v220
    %v258 = vpack.c.b16 %v243, %v242
    %v259 = vpack.c.b16 %v245, %v244
    %v260 = vpack.c.b16 %v247, %v246
    %v261 = vpack.c.b16 %v249, %v248
    %v262 = vpack.c.b16 %v251, %v250
    %v263 = vpack.c.b16 %v253, %v252
    %v264 = vpack.c.b16 %v255, %v254
    %v265 = vpack.c.b16 %v257, %v256
    %274 = vmatprep.subr.bf16.mxu0 0
    %275 = vmatpush1.bf16.msra.mxu0 %v265
    %276 = vmatprep.subr.bf16.mxu0 0
    %277 = vmatpush1.bf16.msra.mxu0 %v264
    %278 = vmatprep.subr.bf16.mxu0 0
    %279 = vmatpush1.bf16.msra.mxu0 %v263
    %280 = vmatprep.subr.bf16.mxu0 0
    %281 = vmatpush1.bf16.msra.mxu0 %v262
    %282 = vmatprep.subr.bf16.mxu0 0
    %283 = vmatpush1.bf16.msra.mxu0 %v261
    %284 = vmatprep.subr.bf16.mxu0 0
    %285 = vmatpush1.bf16.msra.mxu0 %v260
    %286 = vmatprep.subr.bf16.mxu0 0
    %287 = vmatpush1.bf16.msra.mxu0 %v259
    %288 = vmatprep.subr.bf16.mxu0 0
    %289 = vmatpush1.bf16.msra.mxu0 %v258
    %290 = vmatprep.subr.bf16.mxu0 0
    %291 = vmatpush2.bf16.msra.mxu0 0
    %292 = vmatprep.subr.bf16.mxu0 0
    %293 = vmatpush2.bf16.msra.mxu0 0
    %294 = vmatprep.subr.bf16.mxu0 0
    %295 = vmatpush2.bf16.msra.mxu0 0
    %296 = vmatprep.subr.bf16.mxu0 0
    %297 = vmatpush2.bf16.msra.mxu0 0
    %298 = vmatprep.subr.bf16.mxu0 0
    %299 = vmatpush2.bf16.msra.mxu0 0
    %300 = vmatprep.subr.bf16.mxu0 0
    %301 = vmatpush2.bf16.msra.mxu0 0
    %302 = vmatprep.subr.bf16.mxu0 0
    %303 = vmatpush2.bf16.msra.mxu0 0
    %304 = vmatprep.subr.bf16.mxu0 0
    %305 = vmatpush2.bf16.msra.mxu0 0
    %306 = vmatprep.mubr.bf16.mxu0 0
    %307 = vmatmul.mubr.bf16.gmra.mxu0 %v204
    %v308 = vpop.f32.mrf.mxu0
    %v309 = vadd.f32 %v225, %v308
    %v310 = vpop.f32.mrf.mxu0
    %v311 = vpop.f32.mrf.mxu0
    %v312 = vpop.f32.mrf.mxu0
    %313 = vdwg.mxu0
    %v314 = vmax.f32 %v309, 0.0
    %v315 = vpack.c.bf16 %v314, %v314
    %v316 = vld [vmem:[%s4] sm:$0xf]
    %v317 = vld [vmem:[%s4 + $0x4] sm:$0xf]
    %v318 = vld [vmem:[%s4 + $0x8] sm:$0xf]
    %v319 = vld [vmem:[%s4 + $0xc] sm:$0xf]
    %v320 = vld [vmem:[%s4 + $0x10] sm:$0xf]
    %v321 = vld [vmem:[%s4 + $0x14] sm:$0xf]
    %v322 = vld [vmem:[%s4 + $0x18] sm:$0xf]
    %v323 = vld [vmem:[%s4 + $0x1c] sm:$0xf]
    %v324 = vld [vmem:[%s4 + $0x20] sm:$0xf]
    %v325 = vld [vmem:[%s4 + $0x24] sm:$0xf]
    %v326 = vld [vmem:[%s4 + $0x28] sm:$0xf]
    %v327 = vld [vmem:[%s4 + $0x2c] sm:$0xf]
    %v328 = vld [vmem:[%s4 + $0x30] sm:$0xf]
    %v329 = vld [vmem:[%s4 + $0x34] sm:$0xf]
    %v330 = vld [vmem:[%s4 + $0x38] sm:$0xf]
    %v331 = vld [vmem:[%s4 + $0x3c] sm:$0xf]
    %v332 = vld [vmem:[%s7 + $0x2] sm:$0x1]
    %v333 = vlaneseq
    %v334 = vshrl.u32 %v333, 7
    %v335 = vsub.s32 0, %v334
    %v336 = vrot.slane %v332, %v335
    %v353 = vunpack.c.l.b16 %v316
    %v354 = vunpack.c.l.b16 %v317
    %v355 = vunpack.c.l.b16 %v318
    %v356 = vunpack.c.l.b16 %v319
    %v357 = vunpack.c.l.b16 %v320
    %v358 = vunpack.c.l.b16 %v321
    %v359 = vunpack.c.l.b16 %v322
    %v360 = vunpack.c.l.b16 %v323
    %v361 = vunpack.c.l.b16 %v324
    %v362 = vunpack.c.l.b16 %v325
    %v363 = vunpack.c.l.b16 %v326
    %v364 = vunpack.c.l.b16 %v327
    %v365 = vunpack.c.l.b16 %v328
    %v366 = vunpack.c.l.b16 %v329
    %v367 = vunpack.c.l.b16 %v330
    %v368 = vunpack.c.l.b16 %v331
    %v369 = vpack.c.b16 %v354, %v353
    %v370 = vpack.c.b16 %v356, %v355
    %v371 = vpack.c.b16 %v358, %v357
    %v372 = vpack.c.b16 %v360, %v359
    %v373 = vpack.c.b16 %v362, %v361
    %v374 = vpack.c.b16 %v364, %v363
    %v375 = vpack.c.b16 %v366, %v365
    %v376 = vpack.c.b16 %v368, %v367
    %385 = vmatprep.subr.bf16.mxu0 0
    %386 = vmatpush1.bf16.msra.mxu0 %v376
    %387 = vmatprep.subr.bf16.mxu0 0
    %388 = vmatpush1.bf16.msra.mxu0 %v375
    %389 = vmatprep.subr.bf16.mxu0 0
    %390 = vmatpush1.bf16.msra.mxu0 %v374
    %391 = vmatprep.subr.bf16.mxu0 0
    %392 = vmatpush1.bf16.msra.mxu0 %v373
    %393 = vmatprep.subr.bf16.mxu0 0
    %394 = vmatpush1.bf16.msra.mxu0 %v372
    %395 = vmatprep.subr.bf16.mxu0 0
    %396 = vmatpush1.bf16.msra.mxu0 %v371
    %397 = vmatprep.subr.bf16.mxu0 0
    %398 = vmatpush1.bf16.msra.mxu0 %v370
    %399 = vmatprep.subr.bf16.mxu0 0
    %400 = vmatpush1.bf16.msra.mxu0 %v369
    %401 = vmatprep.subr.bf16.mxu0 0
    %402 = vmatpush2.bf16.msra.mxu0 0
    %403 = vmatprep.subr.bf16.mxu0 0
    %404 = vmatpush2.bf16.msra.mxu0 0
    %405 = vmatprep.subr.bf16.mxu0 0
    %406 = vmatpush2.bf16.msra.mxu0 0
    %407 = vmatprep.subr.bf16.mxu0 0
    %408 = vmatpush2.bf16.msra.mxu0 0
    %409 = vmatprep.subr.bf16.mxu0 0
    %410 = vmatpush2.bf16.msra.mxu0 0
    %411 = vmatprep.subr.bf16.mxu0 0
    %412 = vmatpush2.bf16.msra.mxu0 0
    %413 = vmatprep.subr.bf16.mxu0 0
    %414 = vmatpush2.bf16.msra.mxu0 0
    %415 = vmatprep.subr.bf16.mxu0 0
    %416 = vmatpush2.bf16.msra.mxu0 0
    %417 = vmatprep.mubr.bf16.mxu0 0
    %418 = vmatmul.mubr.bf16.gmra.mxu0 %v315
    %v419 = vpop.f32.mrf.mxu0
    %v420 = vadd.f32 %v336, %v419
    %v421 = vpop.f32.mrf.mxu0
    %v422 = vpop.f32.mrf.mxu0
    %v423 = vpop.f32.mrf.mxu0
    %424 = vdwg.mxu0
    %v425 = vmax.f32 %v420, 0.0
    %v426 = vpack.c.bf16 %v425, %v425
    %v427 = vld [vmem:[%s5] sm:$0xf]
    %v428 = vld [vmem:[%s5 + $0x4] sm:$0xf]
    %v429 = vld [vmem:[%s5 + $0x8] sm:$0xf]
    %v430 = vld [vmem:[%s5 + $0xc] sm:$0xf]
    %v431 = vld [vmem:[%s5 + $0x10] sm:$0xf]
    %v432 = vld [vmem:[%s5 + $0x14] sm:$0xf]
    %v433 = vld [vmem:[%s5 + $0x18] sm:$0xf]
    %v434 = vld [vmem:[%s5 + $0x1c] sm:$0xf]
    %v435 = vld [vmem:[%s5 + $0x20] sm:$0xf]
    %v436 = vld [vmem:[%s5 + $0x24] sm:$0xf]
    %v437 = vld [vmem:[%s5 + $0x28] sm:$0xf]
    %v438 = vld [vmem:[%s5 + $0x2c] sm:$0xf]
    %v439 = vld [vmem:[%s5 + $0x30] sm:$0xf]
    %v440 = vld [vmem:[%s5 + $0x34] sm:$0xf]
    %v441 = vld [vmem:[%s5 + $0x38] sm:$0xf]
    %v442 = vld [vmem:[%s5 + $0x3c] sm:$0xf]
    %v443 = vld [vmem:[%s7 + $0x3] sm:$0x1]
    %v444 = vlaneseq
    %v445 = vshrl.u32 %v444, 7
    %v446 = vsub.s32 0, %v445
    %v447 = vrot.slane %v443, %v446
    %v464 = vunpack.c.l.b16 %v427
    %v465 = vunpack.c.l.b16 %v428
    %v466 = vunpack.c.l.b16 %v429
    %v467 = vunpack.c.l.b16 %v430
    %v468 = vunpack.c.l.b16 %v431
    %v469 = vunpack.c.l.b16 %v432
    %v470 = vunpack.c.l.b16 %v433
    %v471 = vunpack.c.l.b16 %v434
    %v472 = vunpack.c.l.b16 %v435
    %v473 = vunpack.c.l.b16 %v436
    %v474 = vunpack.c.l.b16 %v437
    %v475 = vunpack.c.l.b16 %v438
    %v476 = vunpack.c.l.b16 %v439
    %v477 = vunpack.c.l.b16 %v440
    %v478 = vunpack.c.l.b16 %v441
    %v479 = vunpack.c.l.b16 %v442
    %v480 = vpack.c.b16 %v465, %v464
    %v481 = vpack.c.b16 %v467, %v466
    %v482 = vpack.c.b16 %v469, %v468
    %v483 = vpack.c.b16 %v471, %v470
    %v484 = vpack.c.b16 %v473, %v472
    %v485 = vpack.c.b16 %v475, %v474
    %v486 = vpack.c.b16 %v477, %v476
    %v487 = vpack.c.b16 %v479, %v478
    %496 = vmatprep.subr.bf16.mxu0 0
    %497 = vmatpush1.bf16.msra.mxu0 %v487
    %498 = vmatprep.subr.bf16.mxu0 0
    %499 = vmatpush1.bf16.msra.mxu0 %v486
    %500 = vmatprep.subr.bf16.mxu0 0
    %501 = vmatpush1.bf16.msra.mxu0 %v485
    %502 = vmatprep.subr.bf16.mxu0 0
    %503 = vmatpush1.bf16.msra.mxu0 %v484
    %504 = vmatprep.subr.bf16.mxu0 0
    %505 = vmatpush1.bf16.msra.mxu0 %v483
    %506 = vmatprep.subr.bf16.mxu0 0
    %507 = vmatpush1.bf16.msra.mxu0 %v482
    %508 = vmatprep.subr.bf16.mxu0 0
    %509 = vmatpush1.bf16.msra.mxu0 %v481
    %510 = vmatprep.subr.bf16.mxu0 0
    %511 = vmatpush1.bf16.msra.mxu0 %v480
    %512 = vmatprep.subr.bf16.mxu0 0
    %513 = vmatpush2.bf16.msra.mxu0 0
    %514 = vmatprep.subr.bf16.mxu0 0
    %515 = vmatpush2.bf16.msra.mxu0 0
    %516 = vmatprep.subr.bf16.mxu0 0
    %517 = vmatpush2.bf16.msra.mxu0 0
    %518 = vmatprep.subr.bf16.mxu0 0
    %519 = vmatpush2.bf16.msra.mxu0 0
    %520 = vmatprep.subr.bf16.mxu0 0
    %521 = vmatpush2.bf16.msra.mxu0 0
    %522 = vmatprep.subr.bf16.mxu0 0
    %523 = vmatpush2.bf16.msra.mxu0 0
    %524 = vmatprep.subr.bf16.mxu0 0
    %525 = vmatpush2.bf16.msra.mxu0 0
    %526 = vmatprep.subr.bf16.mxu0 0
    %527 = vmatpush2.bf16.msra.mxu0 0
    %528 = vmatprep.mubr.bf16.mxu0 0
    %529 = vmatmul.mubr.bf16.gmra.mxu0 %v426
    %v530 = vpop.f32.mrf.mxu0
    %v531 = vadd.f32 %v447, %v530
    %v532 = vpop.f32.mrf.mxu0
    %v533 = vpop.f32.mrf.mxu0
    %v534 = vpop.f32.mrf.mxu0
    %535 = vdwg.mxu0
    %v536 = vmax.f32 %v531, 0.0
    %v537 = vpack.c.bf16 %v536, %v536
    %v538 = vld [vmem:[%s6] sm:$0xf]
    %v539 = vld [vmem:[%s6 + $0x4] sm:$0xf]
    %v540 = vld [vmem:[%s6 + $0x8] sm:$0xf]
    %v541 = vld [vmem:[%s6 + $0xc] sm:$0xf]
    %v542 = vld [vmem:[%s6 + $0x10] sm:$0xf]
    %v543 = vld [vmem:[%s6 + $0x14] sm:$0xf]
    %v544 = vld [vmem:[%s6 + $0x18] sm:$0xf]
    %v545 = vld [vmem:[%s6 + $0x1c] sm:$0xf]
    %v546 = vld [vmem:[%s6 + $0x20] sm:$0xf]
    %v547 = vld [vmem:[%s6 + $0x24] sm:$0xf]
    %v548 = vld [vmem:[%s6 + $0x28] sm:$0xf]
    %v549 = vld [vmem:[%s6 + $0x2c] sm:$0xf]
    %v550 = vld [vmem:[%s6 + $0x30] sm:$0xf]
    %v551 = vld [vmem:[%s6 + $0x34] sm:$0xf]
    %v552 = vld [vmem:[%s6 + $0x38] sm:$0xf]
    %v553 = vld [vmem:[%s6 + $0x3c] sm:$0xf]
    %v554 = vld [vmem:[%s7 + $0x4] sm:$0x1]
    %v555 = vlaneseq
    %v556 = vshrl.u32 %v555, 7
    %v557 = vsub.s32 0, %v556
    %v558 = vrot.slane %v554, %v557
    %v575 = vunpack.c.l.b16 %v538
    %v576 = vunpack.c.l.b16 %v539
    %v577 = vunpack.c.l.b16 %v540
    %v578 = vunpack.c.l.b16 %v541
    %v579 = vunpack.c.l.b16 %v542
    %v580 = vunpack.c.l.b16 %v543
    %v581 = vunpack.c.l.b16 %v544
    %v582 = vunpack.c.l.b16 %v545
    %v583 = vunpack.c.l.b16 %v546
    %v584 = vunpack.c.l.b16 %v547
    %v585 = vunpack.c.l.b16 %v548
    %v586 = vunpack.c.l.b16 %v549
    %v587 = vunpack.c.l.b16 %v550
    %v588 = vunpack.c.l.b16 %v551
    %v589 = vunpack.c.l.b16 %v552
    %v590 = vunpack.c.l.b16 %v553
    %v591 = vpack.c.b16 %v576, %v575
    %v592 = vpack.c.b16 %v578, %v577
    %v593 = vpack.c.b16 %v580, %v579
    %v594 = vpack.c.b16 %v582, %v581
    %v595 = vpack.c.b16 %v584, %v583
    %v596 = vpack.c.b16 %v586, %v585
    %v597 = vpack.c.b16 %v588, %v587
    %v598 = vpack.c.b16 %v590, %v589
    %607 = vmatprep.subr.bf16.mxu0 0
    %608 = vmatpush1.bf16.msra.mxu0 %v598
    %609 = vmatprep.subr.bf16.mxu0 0
    %610 = vmatpush1.bf16.msra.mxu0 %v597
    %611 = vmatprep.subr.bf16.mxu0 0
    %612 = vmatpush1.bf16.msra.mxu0 %v596
    %613 = vmatprep.subr.bf16.mxu0 0
    %614 = vmatpush1.bf16.msra.mxu0 %v595
    %615 = vmatprep.subr.bf16.mxu0 0
    %616 = vmatpush1.bf16.msra.mxu0 %v594
    %617 = vmatprep.subr.bf16.mxu0 0
    %618 = vmatpush1.bf16.msra.mxu0 %v593
    %619 = vmatprep.subr.bf16.mxu0 0
    %620 = vmatpush1.bf16.msra.mxu0 %v592
    %621 = vmatprep.subr.bf16.mxu0 0
    %622 = vmatpush1.bf16.msra.mxu0 %v591
    %623 = vmatprep.subr.bf16.mxu0 0
    %624 = vmatpush2.bf16.msra.mxu0 0
    %625 = vmatprep.subr.bf16.mxu0 0
    %626 = vmatpush2.bf16.msra.mxu0 0
    %627 = vmatprep.subr.bf16.mxu0 0
    %628 = vmatpush2.bf16.msra.mxu0 0
    %629 = vmatprep.subr.bf16.mxu0 0
    %630 = vmatpush2.bf16.msra.mxu0 0
    %631 = vmatprep.subr.bf16.mxu0 0
    %632 = vmatpush2.bf16.msra.mxu0 0
    %633 = vmatprep.subr.bf16.mxu0 0
    %634 = vmatpush2.bf16.msra.mxu0 0
    %635 = vmatprep.subr.bf16.mxu0 0
    %636 = vmatpush2.bf16.msra.mxu0 0
    %637 = vmatprep.subr.bf16.mxu0 0
    %638 = vmatpush2.bf16.msra.mxu0 0
    %639 = vmatprep.mubr.bf16.mxu0 0
    %640 = vmatmul.mubr.bf16.gmra.mxu0 %v537
    %v641 = vpop.f32.mrf.mxu0
    %v642 = vadd.f32 %v558, %v641
    %v643 = vpop.f32.mrf.mxu0
    %v644 = vpop.f32.mrf.mxu0
    %v645 = vpop.f32.mrf.mxu0
    %646 = vdwg.mxu0
    %647 = vst [vmem:[#allocation2] sm:$0xff] %v642
    // Predicated region
    $region34: #{_distance_forward_impl.1} parent=1 // pred_check
      _
    $region35: #{_distance_forward_impl.1} parent=1 // pred_check_branch
      %649 = sbr.rel (0) target = $region37
    $region36: #{_distance_forward_impl.1} parent=1 // pred_region
      %s651 = ssub.s32 128, 128
      %652 = vsyncadd [#allocation3], %s651
      %s654 = sshll.u32 [#allocation2], 4
      %s655 = int_to_ptr.vmem [resolvable:$true] %s654
      %657 = dma.vmem_to_hbm [thread:$0]  %s655, 128, %s8, [#allocation3]
    $region37: #{_distance_forward_impl.1} parent=1 // pred_fallthru
      _
    // Predicated region
    $region38: #{_distance_forward_impl.1} parent=1 // pred_check
      _
    $region39: #{_distance_forward_impl.1} parent=1 // pred_check_branch
      %659 = sbr.rel (0) target = $region41
    $region40: #{_distance_forward_impl.1} parent=1 // pred_region
      %660 = dma.done [#allocation3], 128
    $region41: #{_distance_forward_impl.1} parent=1 // pred_fallthru
      _
    %661 = vsyncpa [#allocation3], 1

</llo_original>
